<compile_context>
chip_gen: v7x
topology: tpu7x:2x2x1
jax: 0.10.0
libtpu: 0.0.40
codegen_flags: <defaults>
</compile_context>

<pallas_src>
import jax
import jax.numpy as jnp
from jax.experimental import pallas as pl
from jax.experimental.pallas import tpu as pltpu


_LANE = 128


def _round_up(x, m):
    return ((x + m - 1) // m) * m


def _cdiv(a, b):
    return -(-a // b)


def _chip_info():
    """Return (vmem_capacity_bytes, num_tensorcores) with safe fallbacks."""
    vmem_cap = 128 << 20      # v5e/v6e physical VMEM
    num_cores = 1
    try:
        info = pltpu.get_tpu_info()
        vmem_cap = int(getattr(info, "vmem_capacity_bytes", vmem_cap))
    except Exception:
        pass
    try:
        kind = jax.devices()[0].device_kind.lower()
        if "7" in kind:        # v7x: 2 TensorCores / chip, 64 MiB VMEM per TC
            num_cores = 2
            vmem_cap = min(vmem_cap, 64 << 20)
    except Exception:
        pass
    return vmem_cap, num_cores


def _if_node_kernel(w_ref, thr_ref, x_ref, o_ref):
    # h = W @ x_tile + bias ; spike = heaviside(h) == (h >= 0)
    # folded as (W @ x_tile) >= thr  with thr = -bias (drops one VPU add/elem).
    # TODO(synk): surrogate gradient (backward) is not part of this forward kernel.
    dot = jnp.dot(w_ref[...], x_ref[...].astype(jnp.float32),
                  preferred_element_type=jnp.float32)
    o_ref[...] = (dot >= thr_ref[...]).astype(o_ref.dtype)


def if_node5_forward(x_seq, weight, bias, *, tn_max=65536):
    """IFNode5 forward.  x_seq: [T, ...];  weight: [T, T];  bias: [T]."""
    T = x_seq.shape[0]
    x_flat = x_seq.reshape(T, -1)          # metadata-only view, native dtype
    N = x_flat.shape[1]

    x_bytes = x_flat.dtype.itemsize
    o_bytes = jnp.dtype(x_seq.dtype).itemsize

    vmem_cap, num_cores = _chip_info()

    # ---- lane-dense tile width ---------------------------------------------
    # Multiple of 128, as large as tn_max / N / VMEM allow.  Double-buffered
    # x + out tiles must fit well inside the chip's VMEM.
    n128 = _round_up(N, _LANE)
    budget = int(vmem_cap * 0.45) - 2 * T * T * 4 - 2 * T * 4 - (2 << 20)
    budget = max(budget, 1 << 20)
    tn_fit = (budget // (2 * T * (x_bytes + o_bytes))) // _LANE * _LANE
    tn = max(_LANE, min(int(tn_max), n128, max(tn_fit, _LANE)))

    steps = _cdiv(n128, tn)
    if num_cores >= 2 and n128 > _LANE and steps % 2 == 1:
        # v7x: shard grid across 2 TensorCores with a balanced (even) step count.
        tn = max(_LANE, _round_up(_cdiv(n128, steps + 1), _LANE))
        steps = _cdiv(n128, tn)

    grid = (_cdiv(N, tn),)

    # resident parameters (tiny: T x T weight, T x 1 threshold)
    w_f32 = weight.astype(jnp.float32)
    thr = (-bias).reshape(T, 1).astype(jnp.float32)

    # VMEM limit from the actual tile footprint; tight cap only on v7x.
    vmem_bytes = (2 * T * tn * x_bytes + 2 * T * tn * o_bytes
                  + 2 * T * T * 4 + 2 * T * 4 + (2 << 20))
    vmem_cap_limit = (30 << 20) if num_cores >= 2 else (64 << 20)
    vmem_bytes = int(min(max(vmem_bytes, 8 << 20), vmem_cap_limit))

    cost = pl.CostEstimate(
        flops=2 * T * T * N,
        transcendentals=0,
        bytes_accessed=T * N * (x_bytes + o_bytes) + T * T * 4 + T * 4,
    )

    out = pl.pallas_call(
        _if_node_kernel,
        out_shape=jax.ShapeDtypeStruct((T, N), x_seq.dtype),
        grid_spec=pltpu.PrefetchScalarGridSpec(
            num_scalar_prefetch=0,
            grid=grid,
            in_specs=[
                pl.BlockSpec((T, T), lambda j: (0, 0)),    # weight    (resident)
                pl.BlockSpec((T, 1), lambda j: (0, 0)),    # threshold (resident)
                pl.BlockSpec((T, tn), lambda j: (0, j)),   # x tile (lane-dense)
            ],
            out_specs=pl.BlockSpec((T, tn), lambda j: (0, j)),
        ),
        compiler_params=pltpu.CompilerParams(
            dimension_semantics=("parallel",),
            vmem_limit_bytes=vmem_bytes,
        ),
        cost_estimate=cost,
    )(w_f32, thr, x_flat)

    return out.reshape(x_seq.shape)


def make_params(T, key):
    """Mirror nn.Linear(T, T) default init; bias overridden to constant -1."""
    bound = 1.0 / jnp.sqrt(jnp.float32(T))
    weight = jax.random.uniform(key, (T, T), jnp.float32, -bound, bound)
    bias = jnp.full((T,), -1.0, jnp.float32)
    return weight, bias


def reference_forward(x_seq, weight, bias):
    T = x_seq.shape[0]
    x_flat = x_seq.reshape(T, -1).astype(jnp.float32)
    h = bias[:, None] + weight @ x_flat
    return (h >= 0.0).astype(x_seq.dtype).reshape(x_seq.shape)


if __name__ == "__main__":
    T = 8
    B, C, H, W = 2, 4, 16, 16

    key = jax.random.PRNGKey(0)
    k_x, k_w = jax.random.split(key)

    x_seq = jax.random.normal(k_x, (T, B, C, H, W), jnp.float32)
    weight, bias = make_params(T, k_w)

    out = if_node5_forward(x_seq, weight, bias)
    out = jax.block_until_ready(out)

    ref = reference_forward(x_seq, weight, bias)
    assert out.shape == x_seq.shape
    assert jnp.allclose(out, ref), "mismatch vs reference"

    print("KERNEL_OK")
</pallas_src>

<mosaic_0001>
module attributes {stable_mosaic.version = 11 : i64} {
  func.func @_if_node_kernel(%arg0: i32, %arg1: memref<8x8xf32, #tpu.memory_space<vmem>>, %arg2: memref<8x1xf32, #tpu.memory_space<vmem>>, %arg3: memref<8x2048xf32, #tpu.memory_space<vmem>>, %arg4: memref<8x2048xf32, #tpu.memory_space<vmem>>) attributes {dimension_semantics = [#tpu.dimension_semantics<parallel>], iteration_bounds = array<i64: 1>, scalar_prefetch = 0 : i64, scratch_operands = 0 : i64, tpu.core_type = #tpu.core_type<tc>, window_params = [{pipeline_mode = #tpu.pipeline_mode<synchronous>, transform_indices = @transform_0, window_bounds = array<i64: 8, 8>}, {pipeline_mode = #tpu.pipeline_mode<synchronous>, transform_indices = @transform_1, window_bounds = array<i64: 8, 1>}, {transform_indices = @transform_2, window_bounds = array<i64: 8, 2048>}, {transform_indices = @transform_3, window_bounds = array<i64: 8, 2048>}]} {
    %c0 = arith.constant 0 : index
    %c0_0 = arith.constant 0 : index
    %0 = vector.load %arg1[%c0, %c0_0] : memref<8x8xf32, #tpu.memory_space<vmem>>, vector<8x8xf32>
    %c0_1 = arith.constant 0 : index
    %c0_2 = arith.constant 0 : index
    %1 = vector.load %arg3[%c0_1, %c0_2] : memref<8x2048xf32, #tpu.memory_space<vmem>>, vector<8x2048xf32>
    %cst = arith.constant dense<0.000000e+00> : vector<8x2048xf32>
    %2 = tpu.matmul %0, %1, %cst {dimension_numbers = #tpu.dot_dimension_numbers<[1], [0], [0], [1], [0, 0, 1, 1], [], []>} : vector<8x8xf32>, vector<8x2048xf32>, vector<8x2048xf32> -> vector<8x2048xf32>
    %c0_3 = arith.constant 0 : index
    %c0_4 = arith.constant 0 : index
    %3 = vector.load %arg2[%c0_3, %c0_4] : memref<8x1xf32, #tpu.memory_space<vmem>>, vector<8x1xf32>
    %4 = vector.broadcast %3 : vector<8x1xf32> to vector<8x2048xf32>
    %5 = arith.cmpf oge, %2, %4 : vector<8x2048xf32>
    %6 = arith.extui %5 : vector<8x2048xi1> to vector<8x2048xi32>
    %7 = arith.sitofp %6 : vector<8x2048xi32> to vector<8x2048xf32>
    %c0_5 = arith.constant 0 : index
    %c0_6 = arith.constant 0 : index
    %8 = vector.load %arg4[%c0_5, %c0_6] : memref<8x2048xf32, #tpu.memory_space<vmem>>, vector<8x2048xf32>
    tpu.vector_store %arg4[%c0_5, %c0_6], %7 {strides = array<i32>} : memref<8x2048xf32, #tpu.memory_space<vmem>>, vector<8x2048xf32>,
    return
  }
  func.func @transform_0(%arg0: i32) -> (i32, i32) {
    %c0_i32 = arith.constant 0 : i32
    %c0_i32_0 = arith.constant 0 : i32
    %c0_i32_1 = arith.constant 0 : i32
    return %c0_i32, %c0_i32_0 : i32, i32
  }
  func.func @transform_1(%arg0: i32) -> (i32, i32) {
    %c0_i32 = arith.constant 0 : i32
    %c0_i32_0 = arith.constant 0 : i32
    %c0_i32_1 = arith.constant 0 : i32
    return %c0_i32, %c0_i32_0 : i32, i32
  }
  func.func @transform_2(%arg0: i32) -> (i32, i32) {
    %c0_i32 = arith.constant 0 : i32
    %c0_i32_0 = arith.constant 0 : i32
    return %c0_i32, %arg0 : i32, i32
  }
  func.func @transform_3(%arg0: i32) -> (i32, i32) {
    %c0_i32 = arith.constant 0 : i32
    %c0_i32_0 = arith.constant 0 : i32
    return %c0_i32, %arg0 : i32, i32
  }
}

</mosaic_0001>

<llo_original>
// kernel: tpu_custom_call.1
$region0: #{tpu_custom_call.1}
  #allocation0 [shape = 'u32[]', space=smem, size = 0x4, offset = 0x4, fixed_abs, tag = 'smem constant byte address 0x4 - core index']
  #allocation1 [shape = 'u32[144,128]{1,0:T(1,128)}', space=vmem, size = 0x12000, scoped, tag = 'internal scratch']
  %s0 = inlined_call_operand.vmem [shape: f32[8,8], index: 0, kind: input, shape index: {}]
  %s1 = inlined_call_operand.vmem [shape: f32[8,1], index: 1, kind: input, shape index: {}]
  %s2 = inlined_call_operand.hbm [shape: f32[8,2048], index: 2, kind: input, shape index: {}]
  %s3 = inlined_call_operand.hbm [shape: f32[8,2048], index: 3, kind: output, shape index: {}]
  %s4 = sld [smem:[#allocation0]]
  $region26: #{tpu_custom_call.1} parent=0
    _
  %s6 = ssub.s32 1, %s4
  %s7 = scalar_select 0, %s6, %s4
  $region1: #{tpu_custom_call.1} parent=0
    #allocation2 [shape = 'u8[65536]{0}', space=vmem, size = 0x10000, scoped, tag = 'input window, operand 2, single buffered']
    #allocation3 [shape = 's32[1]{0}', space=sflag, size = 0x4, scoped, tag = 'scoped memory for tpu_custom_call.1']
    #allocation4 [shape = 's32[1]{0}', space=sflag, size = 0x4, scoped, tag = 'scoped memory for tpu_custom_call.1']
    #allocation5 [shape = 'u8[65536]{0}', space=vmem, size = 0x10000, scoped, tag = 'output window, operand 0, single buffered']
    %8 = vsyncpa [#allocation3], 0
    %9 = vsyncpa [#allocation4], 0
    // Predicated region
    $region2: #{tpu_custom_call.1} parent=1 // pred_check
      _
    $region3: #{tpu_custom_call.1} parent=1 // pred_check_branch
      %11 = sbr.rel (0) target = $region5
    $region4: #{tpu_custom_call.1} parent=1 // pred_region
      _
    $region5: #{tpu_custom_call.1} parent=1 // pred_fallthru
      _
    // Predicated region
    $region6: #{tpu_custom_call.1} parent=1 // pred_check
      _
    $region7: #{tpu_custom_call.1} parent=1 // pred_check_branch
      %13 = sbr.rel (0) target = $region9
    $region8: #{tpu_custom_call.1} parent=1 // pred_region
      _
    $region9: #{tpu_custom_call.1} parent=1 // pred_fallthru
      _
    // Predicated region
    $region10: #{tpu_custom_call.1} parent=1 // pred_check
      _
    $region11: #{tpu_custom_call.1} parent=1 // pred_check_branch
      %15 = sbr.rel (0) target = $region13
    $region12: #{tpu_custom_call.1} parent=1 // pred_region
      %s17 = ssub.s32 2048, 2048
      %18 = vsyncadd [#allocation3], %s17
      %s20 = sshll.u32 [#allocation2], 4
      %s21 = int_to_ptr.vmem [resolvable:$true] %s20
      %23 = dma.hbm_to_vmem [thread:$0]  %s2, 2048, %s21, [#allocation3]
    $region13: #{tpu_custom_call.1} parent=1 // pred_fallthru
      _
    // Predicated region
    $region14: #{tpu_custom_call.1} parent=1 // pred_check
      _
    $region15: #{tpu_custom_call.1} parent=1 // pred_check_branch
      %25 = sbr.rel (0) target = $region17
    $region16: #{tpu_custom_call.1} parent=1 // pred_region
      %26 = dma.done [#allocation3], 2048
    $region17: #{tpu_custom_call.1} parent=1 // pred_fallthru
      _
    %v27 = vld [vmem:[%s0] sm:$0xff]
    %v28 = vld [vmem:[#allocation2] sm:$0xff]
    %v29 = vld [vmem:[#allocation2 + $0x8] sm:$0xff]
    %v30 = vld [vmem:[#allocation2 + $0x10] sm:$0xff]
    %v31 = vld [vmem:[#allocation2 + $0x18] sm:$0xff]
    %v32 = vld [vmem:[#allocation2 + $0x20] sm:$0xff]
    %v33 = vld [vmem:[#allocation2 + $0x28] sm:$0xff]
    %v34 = vld [vmem:[#allocation2 + $0x30] sm:$0xff]
    %v35 = vld [vmem:[#allocation2 + $0x38] sm:$0xff]
    %v36 = vld [vmem:[#allocation2 + $0x40] sm:$0xff]
    %v37 = vld [vmem:[#allocation2 + $0x48] sm:$0xff]
    %v38 = vld [vmem:[#allocation2 + $0x50] sm:$0xff]
    %v39 = vld [vmem:[#allocation2 + $0x58] sm:$0xff]
    %v40 = vld [vmem:[#allocation2 + $0x60] sm:$0xff]
    %v41 = vld [vmem:[#allocation2 + $0x68] sm:$0xff]
    %v42 = vld [vmem:[#allocation2 + $0x70] sm:$0xff]
    %v43 = vld [vmem:[#allocation2 + $0x78] sm:$0xff]
    %vm44 = vcmask 64512
    %v46 = vsel %vm44, %v27, 0
    %48 = vmatprep.subr.mxu0 %v29
    %49 = vmatpush1.msra.mxu0 %v28
    %50 = vmatprep.subr.mxu0 0.0
    %51 = vmatpush1.msra.mxu0 0.0
    %52 = vmatprep.subr.mxu0 0.0
    %53 = vmatpush1.msra.mxu0 0.0
    %54 = vmatprep.subr.mxu0 0.0
    %55 = vmatpush1.msra.mxu0 0.0
    %56 = vmatprep.subr.mxu0 0.0
    %57 = vmatpush1.msra.mxu0 0.0
    %58 = vmatprep.subr.mxu0 0.0
    %59 = vmatpush1.msra.mxu0 0.0
    %60 = vmatprep.subr.mxu0 0.0
    %61 = vmatpush1.msra.mxu0 0.0
    %62 = vmatprep.subr.mxu0 0.0
    %63 = vmatpush1.msra.mxu0 0.0
    %64 = vmatprep.subr.mxu0 0.0
    %65 = vmatpush1.msra.mxu0 0.0
    %66 = vmatprep.subr.mxu0 0.0
    %67 = vmatpush1.msra.mxu0 0.0
    %68 = vmatprep.subr.mxu0 0.0
    %69 = vmatpush1.msra.mxu0 0.0
    %70 = vmatprep.subr.mxu0 0.0
    %71 = vmatpush1.msra.mxu0 0.0
    %72 = vmatprep.subr.mxu0 0.0
    %73 = vmatpush1.msra.mxu0 0.0
    %74 = vmatprep.subr.mxu0 0.0
    %75 = vmatpush1.msra.mxu0 0.0
    %76 = vmatprep.subr.mxu0 0.0
    %77 = vmatpush1.msra.mxu0 0.0
    %78 = vmatprep.subr.mxu0 0.0
    %79 = vmatpush1.msra.mxu0 0.0
    %80 = vmatprep.subr.mxu0 0.0
    %81 = vmatpush1.msra.mxu0 0.0
    %82 = vmatprep.subr.mxu0 0.0
    %83 = vmatpush1.msra.mxu0 0.0
    %84 = vmatprep.subr.mxu0 0.0
    %85 = vmatpush1.msra.mxu0 0.0
    %86 = vmatprep.subr.mxu0 0.0
    %87 = vmatpush1.msra.mxu0 0.0
    %88 = vmatprep.subr.mxu0 0.0
    %89 = vmatpush1.msra.mxu0 0.0
    %90 = vmatprep.subr.mxu0 0.0
    %91 = vmatpush1.msra.mxu0 0.0
    %92 = vmatprep.subr.mxu0 0.0
    %93 = vmatpush1.msra.mxu0 0.0
    %94 = vmatprep.subr.mxu0 0.0
    %95 = vmatpush1.msra.mxu0 0.0
    %96 = vmatprep.subr.mxu0 0.0
    %97 = vmatpush1.msra.mxu0 0.0
    %98 = vmatprep.subr.mxu0 0.0
    %99 = vmatpush1.msra.mxu0 0.0
    %100 = vmatprep.subr.mxu0 0.0
    %101 = vmatpush1.msra.mxu0 0.0
    %102 = vmatprep.subr.mxu0 0.0
    %103 = vmatpush1.msra.mxu0 0.0
    %104 = vmatprep.subr.mxu0 0.0
    %105 = vmatpush1.msra.mxu0 0.0
    %106 = vmatprep.subr.mxu0 0.0
    %107 = vmatpush1.msra.mxu0 0.0
    %108 = vmatprep.subr.mxu0 0.0
    %109 = vmatpush1.msra.mxu0 0.0
    %110 = vmatprep.subr.mxu0 0.0
    %111 = vmatpush1.msra.mxu0 0.0
    %112 = vmatprep.mubr.f32.mxu0 0.0
    %113 = vmatmul.mubr.f32.gmra.mrb[0].mxu0 %v46
    %v114 = vpop.f32.mrb[0].mxu0
    %v115 = vadd.f32 0.0, %v114
    %v116 = vpop.f32.mrb[0].mxu0
    %v117 = vadd.f32 0.0, %v116
    %118 = vdwg.mxu0
    %119 = vmatprep.subr.mxu0 %v31
    %120 = vmatpush1.msra.mxu0 %v30
    %121 = vmatprep.subr.mxu0 0.0
    %122 = vmatpush1.msra.mxu0 0.0
    %123 = vmatprep.subr.mxu0 0.0
    %124 = vmatpush1.msra.mxu0 0.0
    %125 = vmatprep.subr.mxu0 0.0
    %126 = vmatpush1.msra.mxu0 0.0
    %127 = vmatprep.subr.mxu0 0.0
    %128 = vmatpush1.msra.mxu0 0.0
    %129 = vmatprep.subr.mxu0 0.0
    %130 = vmatpush1.msra.mxu0 0.0
    %131 = vmatprep.subr.mxu0 0.0
    %132 = vmatpush1.msra.mxu0 0.0
    %133 = vmatprep.subr.mxu0 0.0
    %134 = vmatpush1.msra.mxu0 0.0
    %135 = vmatprep.subr.mxu0 0.0
    %136 = vmatpush1.msra.mxu0 0.0
    %137 = vmatprep.subr.mxu0 0.0
    %138 = vmatpush1.msra.mxu0 0.0
    %139 = vmatprep.subr.mxu0 0.0
    %140 = vmatpush1.msra.mxu0 0.0
    %141 = vmatprep.subr.mxu0 0.0
    %142 = vmatpush1.msra.mxu0 0.0
    %143 = vmatprep.subr.mxu0 0.0
    %144 = vmatpush1.msra.mxu0 0.0
    %145 = vmatprep.subr.mxu0 0.0
    %146 = vmatpush1.msra.mxu0 0.0
    %147 = vmatprep.subr.mxu0 0.0
    %148 = vmatpush1.msra.mxu0 0.0
    %149 = vmatprep.subr.mxu0 0.0
    %150 = vmatpush1.msra.mxu0 0.0
    %151 = vmatprep.subr.mxu0 0.0
    %152 = vmatpush1.msra.mxu0 0.0
    %153 = vmatprep.subr.mxu0 0.0
    %154 = vmatpush1.msra.mxu0 0.0
    %155 = vmatprep.subr.mxu0 0.0
    %156 = vmatpush1.msra.mxu0 0.0
    %157 = vmatprep.subr.mxu0 0.0
    %158 = vmatpush1.msra.mxu0 0.0
    %159 = vmatprep.subr.mxu0 0.0
    %160 = vmatpush1.msra.mxu0 0.0
    %161 = vmatprep.subr.mxu0 0.0
    %162 = vmatpush1.msra.mxu0 0.0
    %163 = vmatprep.subr.mxu0 0.0
    %164 = vmatpush1.msra.mxu0 0.0
    %165 = vmatprep.subr.mxu0 0.0
    %166 = vmatpush1.msra.mxu0 0.0
    %167 = vmatprep.subr.mxu0 0.0
    %168 = vmatpush1.msra.mxu0 0.0
    %169 = vmatprep.subr.mxu0 0.0
    %170 = vmatpush1.msra.mxu0 0.0
    %171 = vmatprep.subr.mxu0 0.0
    %172 = vmatpush1.msra.mxu0 0.0
    %173 = vmatprep.subr.mxu0 0.0
    %174 = vmatpush1.msra.mxu0 0.0
    %175 = vmatprep.subr.mxu0 0.0
    %176 = vmatpush1.msra.mxu0 0.0
    %177 = vmatprep.subr.mxu0 0.0
    %178 = vmatpush1.msra.mxu0 0.0
    %179 = vmatprep.subr.mxu0 0.0
    %180 = vmatpush1.msra.mxu0 0.0
    %181 = vmatprep.subr.mxu0 0.0
    %182 = vmatpush1.msra.mxu0 0.0
    %183 = vmatprep.mubr.f32.mxu0 0.0
    %184 = vmatmul.mubr.f32.gmra.mrb[0].mxu0 %v46
    %v185 = vpop.f32.mrb[0].mxu0
    %v186 = vadd.f32 0.0, %v185
    %v187 = vpop.f32.mrb[0].mxu0
    %v188 = vadd.f32 0.0, %v187
    %189 = vdwg.mxu0
    %190 = vmatprep.subr.mxu0 %v33
    %191 = vmatpush1.msra.mxu0 %v32
    %192 = vmatprep.subr.mxu0 0.0
    %193 = vmatpush1.msra.mxu0 0.0
    %194 = vmatprep.subr.mxu0 0.0
    %195 = vmatpush1.msra.mxu0 0.0
    %196 = vmatprep.subr.mxu0 0.0
    %197 = vmatpush1.msra.mxu0 0.0
    %198 = vmatprep.subr.mxu0 0.0
    %199 = vmatpush1.msra.mxu0 0.0
    %200 = vmatprep.subr.mxu0 0.0
    %201 = vmatpush1.msra.mxu0 0.0
    %202 = vmatprep.subr.mxu0 0.0
    %203 = vmatpush1.msra.mxu0 0.0
    %204 = vmatprep.subr.mxu0 0.0
    %205 = vmatpush1.msra.mxu0 0.0
    %206 = vmatprep.subr.mxu0 0.0
    %207 = vmatpush1.msra.mxu0 0.0
    %208 = vmatprep.subr.mxu0 0.0
    %209 = vmatpush1.msra.mxu0 0.0
    %210 = vmatprep.subr.mxu0 0.0
    %211 = vmatpush1.msra.mxu0 0.0
    %212 = vmatprep.subr.mxu0 0.0
    %213 = vmatpush1.msra.mxu0 0.0
    %214 = vmatprep.subr.mxu0 0.0
    %215 = vmatpush1.msra.mxu0 0.0
    %216 = vmatprep.subr.mxu0 0.0
    %217 = vmatpush1.msra.mxu0 0.0
    %218 = vmatprep.subr.mxu0 0.0
    %219 = vmatpush1.msra.mxu0 0.0
    %220 = vmatprep.subr.mxu0 0.0
    %221 = vmatpush1.msra.mxu0 0.0
    %222 = vmatprep.subr.mxu0 0.0
    %223 = vmatpush1.msra.mxu0 0.0
    %224 = vmatprep.subr.mxu0 0.0
    %225 = vmatpush1.msra.mxu0 0.0
    %226 = vmatprep.subr.mxu0 0.0
    %227 = vmatpush1.msra.mxu0 0.0
    %228 = vmatprep.subr.mxu0 0.0
    %229 = vmatpush1.msra.mxu0 0.0
    %230 = vmatprep.subr.mxu0 0.0
    %231 = vmatpush1.msra.mxu0 0.0
    %232 = vmatprep.subr.mxu0 0.0
    %233 = vmatpush1.msra.mxu0 0.0
    %234 = vmatprep.subr.mxu0 0.0
    %235 = vmatpush1.msra.mxu0 0.0
    %236 = vmatprep.subr.mxu0 0.0
    %237 = vmatpush1.msra.mxu0 0.0
    %238 = vmatprep.subr.mxu0 0.0
    %239 = vmatpush1.msra.mxu0 0.0
    %240 = vmatprep.subr.mxu0 0.0
    %241 = vmatpush1.msra.mxu0 0.0
    %242 = vmatprep.subr.mxu0 0.0
    %243 = vmatpush1.msra.mxu0 0.0
    %244 = vmatprep.subr.mxu0 0.0
    %245 = vmatpush1.msra.mxu0 0.0
    %246 = vmatprep.subr.mxu0 0.0
    %247 = vmatpush1.msra.mxu0 0.0
    %248 = vmatprep.subr.mxu0 0.0
    %249 = vmatpush1.msra.mxu0 0.0
    %250 = vmatprep.subr.mxu0 0.0
    %251 = vmatpush1.msra.mxu0 0.0
    %252 = vmatprep.subr.mxu0 0.0
    %253 = vmatpush1.msra.mxu0 0.0
    %254 = vmatprep.mubr.f32.mxu0 0.0
    %255 = vmatmul.mubr.f32.gmra.mrb[0].mxu0 %v46
    %v256 = vpop.f32.mrb[0].mxu0
    %v257 = vadd.f32 0.0, %v256
    %v258 = vpop.f32.mrb[0].mxu0
    %v259 = vadd.f32 0.0, %v258
    %260 = vdwg.mxu0
    %261 = vmatprep.subr.mxu0 %v35
    %262 = vmatpush1.msra.mxu0 %v34
    %263 = vmatprep.subr.mxu0 0.0
    %264 = vmatpush1.msra.mxu0 0.0
    %265 = vmatprep.subr.mxu0 0.0
    %266 = vmatpush1.msra.mxu0 0.0
    %267 = vmatprep.subr.mxu0 0.0
    %268 = vmatpush1.msra.mxu0 0.0
    %269 = vmatprep.subr.mxu0 0.0
    %270 = vmatpush1.msra.mxu0 0.0
    %271 = vmatprep.subr.mxu0 0.0
    %272 = vmatpush1.msra.mxu0 0.0
    %273 = vmatprep.subr.mxu0 0.0
    %274 = vmatpush1.msra.mxu0 0.0
    %275 = vmatprep.subr.mxu0 0.0
    %276 = vmatpush1.msra.mxu0 0.0
    %277 = vmatprep.subr.mxu0 0.0
    %278 = vmatpush1.msra.mxu0 0.0
    %279 = vmatprep.subr.mxu0 0.0
    %280 = vmatpush1.msra.mxu0 0.0
    %281 = vmatprep.subr.mxu0 0.0
    %282 = vmatpush1.msra.mxu0 0.0
    %283 = vmatprep.subr.mxu0 0.0
    %284 = vmatpush1.msra.mxu0 0.0
    %285 = vmatprep.subr.mxu0 0.0
    %286 = vmatpush1.msra.mxu0 0.0
    %287 = vmatprep.subr.mxu0 0.0
    %288 = vmatpush1.msra.mxu0 0.0
    %289 = vmatprep.subr.mxu0 0.0
    %290 = vmatpush1.msra.mxu0 0.0
    %291 = vmatprep.subr.mxu0 0.0
    %292 = vmatpush1.msra.mxu0 0.0
    %293 = vmatprep.subr.mxu0 0.0
    %294 = vmatpush1.msra.mxu0 0.0
    %295 = vmatprep.subr.mxu0 0.0
    %296 = vmatpush1.msra.mxu0 0.0
    %297 = vmatprep.subr.mxu0 0.0
    %298 = vmatpush1.msra.mxu0 0.0
    %299 = vmatprep.subr.mxu0 0.0
    %300 = vmatpush1.msra.mxu0 0.0
    %301 = vmatprep.subr.mxu0 0.0
    %302 = vmatpush1.msra.mxu0 0.0
    %303 = vmatprep.subr.mxu0 0.0
    %304 = vmatpush1.msra.mxu0 0.0
    %305 = vmatprep.subr.mxu0 0.0
    %306 = vmatpush1.msra.mxu0 0.0
    %307 = vmatprep.subr.mxu0 0.0
    %308 = vmatpush1.msra.mxu0 0.0
    %309 = vmatprep.subr.mxu0 0.0
    %310 = vmatpush1.msra.mxu0 0.0
    %311 = vmatprep.subr.mxu0 0.0
    %312 = vmatpush1.msra.mxu0 0.0
    %313 = vmatprep.subr.mxu0 0.0
    %314 = vmatpush1.msra.mxu0 0.0
    %315 = vmatprep.subr.mxu0 0.0
    %316 = vmatpush1.msra.mxu0 0.0
    %317 = vmatprep.subr.mxu0 0.0
    %318 = vmatpush1.msra.mxu0 0.0
    %319 = vmatprep.subr.mxu0 0.0
    %320 = vmatpush1.msra.mxu0 0.0
    %321 = vmatprep.subr.mxu0 0.0
    %322 = vmatpush1.msra.mxu0 0.0
    %323 = vmatprep.subr.mxu0 0.0
    %324 = vmatpush1.msra.mxu0 0.0
    %325 = vmatprep.mubr.f32.mxu0 0.0
    %326 = vmatmul.mubr.f32.gmra.mrb[0].mxu0 %v46
    %v327 = vpop.f32.mrb[0].mxu0
    %v328 = vadd.f32 0.0, %v327
    %v329 = vpop.f32.mrb[0].mxu0
    %v330 = vadd.f32 0.0, %v329
    %331 = vdwg.mxu0
    %332 = vmatprep.subr.mxu0 %v37
    %333 = vmatpush1.msra.mxu0 %v36
    %334 = vmatprep.subr.mxu0 0.0
    %335 = vmatpush1.msra.mxu0 0.0
    %336 = vmatprep.subr.mxu0 0.0
    %337 = vmatpush1.msra.mxu0 0.0
    %338 = vmatprep.subr.mxu0 0.0
    %339 = vmatpush1.msra.mxu0 0.0
    %340 = vmatprep.subr.mxu0 0.0
    %341 = vmatpush1.msra.mxu0 0.0
    %342 = vmatprep.subr.mxu0 0.0
    %343 = vmatpush1.msra.mxu0 0.0
    %344 = vmatprep.subr.mxu0 0.0
    %345 = vmatpush1.msra.mxu0 0.0
    %346 = vmatprep.subr.mxu0 0.0
    %347 = vmatpush1.msra.mxu0 0.0
    %348 = vmatprep.subr.mxu0 0.0
    %349 = vmatpush1.msra.mxu0 0.0
    %350 = vmatprep.subr.mxu0 0.0
    %351 = vmatpush1.msra.mxu0 0.0
    %352 = vmatprep.subr.mxu0 0.0
    %353 = vmatpush1.msra.mxu0 0.0
    %354 = vmatprep.subr.mxu0 0.0
    %355 = vmatpush1.msra.mxu0 0.0
    %356 = vmatprep.subr.mxu0 0.0
    %357 = vmatpush1.msra.mxu0 0.0
    %358 = vmatprep.subr.mxu0 0.0
    %359 = vmatpush1.msra.mxu0 0.0
    %360 = vmatprep.subr.mxu0 0.0
    %361 = vmatpush1.msra.mxu0 0.0
    %362 = vmatprep.subr.mxu0 0.0
    %363 = vmatpush1.msra.mxu0 0.0
    %364 = vmatprep.subr.mxu0 0.0
    %365 = vmatpush1.msra.mxu0 0.0
    %366 = vmatprep.subr.mxu0 0.0
    %367 = vmatpush1.msra.mxu0 0.0
    %368 = vmatprep.subr.mxu0 0.0
    %369 = vmatpush1.msra.mxu0 0.0
    %370 = vmatprep.subr.mxu0 0.0
    %371 = vmatpush1.msra.mxu0 0.0
    %372 = vmatprep.subr.mxu0 0.0
    %373 = vmatpush1.msra.mxu0 0.0
    %374 = vmatprep.subr.mxu0 0.0
    %375 = vmatpush1.msra.mxu0 0.0
    %376 = vmatprep.subr.mxu0 0.0
    %377 = vmatpush1.msra.mxu0 0.0
    %378 = vmatprep.subr.mxu0 0.0
    %379 = vmatpush1.msra.mxu0 0.0
    %380 = vmatprep.subr.mxu0 0.0
    %381 = vmatpush1.msra.mxu0 0.0
    %382 = vmatprep.subr.mxu0 0.0
    %383 = vmatpush1.msra.mxu0 0.0
    %384 = vmatprep.subr.mxu0 0.0
    %385 = vmatpush1.msra.mxu0 0.0
    %386 = vmatprep.subr.mxu0 0.0
    %387 = vmatpush1.msra.mxu0 0.0
    %388 = vmatprep.subr.mxu0 0.0
    %389 = vmatpush1.msra.mxu0 0.0
    %390 = vmatprep.subr.mxu0 0.0
    %391 = vmatpush1.msra.mxu0 0.0
    %392 = vmatprep.subr.mxu0 0.0
    %393 = vmatpush1.msra.mxu0 0.0
    %394 = vmatprep.subr.mxu0 0.0
    %395 = vmatpush1.msra.mxu0 0.0
    %396 = vmatprep.mubr.f32.mxu0 0.0
    %397 = vmatmul.mubr.f32.gmra.mrb[0].mxu0 %v46
    %v398 = vpop.f32.mrb[0].mxu0
    %v399 = vadd.f32 0.0, %v398
    %v400 = vpop.f32.mrb[0].mxu0
    %v401 = vadd.f32 0.0, %v400
    %402 = vdwg.mxu0
    %403 = vmatprep.subr.mxu0 %v39
    %404 = vmatpush1.msra.mxu0 %v38
    %405 = vmatprep.subr.mxu0 0.0
    %406 = vmatpush1.msra.mxu0 0.0
    %407 = vmatprep.subr.mxu0 0.0
    %408 = vmatpush1.msra.mxu0 0.0
    %409 = vmatprep.subr.mxu0 0.0
    %410 = vmatpush1.msra.mxu0 0.0
    %411 = vmatprep.subr.mxu0 0.0
    %412 = vmatpush1.msra.mxu0 0.0
    %413 = vmatprep.subr.mxu0 0.0
    %414 = vmatpush1.msra.mxu0 0.0
    %415 = vmatprep.subr.mxu0 0.0
    %416 = vmatpush1.msra.mxu0 0.0
    %417 = vmatprep.subr.mxu0 0.0
    %418 = vmatpush1.msra.mxu0 0.0
    %419 = vmatprep.subr.mxu0 0.0
    %420 = vmatpush1.msra.mxu0 0.0
    %421 = vmatprep.subr.mxu0 0.0
    %422 = vmatpush1.msra.mxu0 0.0
    %423 = vmatprep.subr.mxu0 0.0
    %424 = vmatpush1.msra.mxu0 0.0
    %425 = vmatprep.subr.mxu0 0.0
    %426 = vmatpush1.msra.mxu0 0.0
    %427 = vmatprep.subr.mxu0 0.0
    %428 = vmatpush1.msra.mxu0 0.0
    %429 = vmatprep.subr.mxu0 0.0
    %430 = vmatpush1.msra.mxu0 0.0
    %431 = vmatprep.subr.mxu0 0.0
    %432 = vmatpush1.msra.mxu0 0.0
    %433 = vmatprep.subr.mxu0 0.0
    %434 = vmatpush1.msra.mxu0 0.0
    %435 = vmatprep.subr.mxu0 0.0
    %436 = vmatpush1.msra.mxu0 0.0
    %437 = vmatprep.subr.mxu0 0.0
    %438 = vmatpush1.msra.mxu0 0.0
    %439 = vmatprep.subr.mxu0 0.0
    %440 = vmatpush1.msra.mxu0 0.0
    %441 = vmatprep.subr.mxu0 0.0
    %442 = vmatpush1.msra.mxu0 0.0
    %443 = vmatprep.subr.mxu0 0.0
    %444 = vmatpush1.msra.mxu0 0.0
    %445 = vmatprep.subr.mxu0 0.0
    %446 = vmatpush1.msra.mxu0 0.0
    %447 = vmatprep.subr.mxu0 0.0
    %448 = vmatpush1.msra.mxu0 0.0
    %449 = vmatprep.subr.mxu0 0.0
    %450 = vmatpush1.msra.mxu0 0.0
    %451 = vmatprep.subr.mxu0 0.0
    %452 = vmatpush1.msra.mxu0 0.0
    %453 = vmatprep.subr.mxu0 0.0
    %454 = vmatpush1.msra.mxu0 0.0
    %455 = vmatprep.subr.mxu0 0.0
    %456 = vmatpush1.msra.mxu0 0.0
    %457 = vmatprep.subr.mxu0 0.0
    %458 = vmatpush1.msra.mxu0 0.0
    %459 = vmatprep.subr.mxu0 0.0
    %460 = vmatpush1.msra.mxu0 0.0
    %461 = vmatprep.subr.mxu0 0.0
    %462 = vmatpush1.msra.mxu0 0.0
    %463 = vmatprep.subr.mxu0 0.0
    %464 = vmatpush1.msra.mxu0 0.0
    %465 = vmatprep.subr.mxu0 0.0
    %466 = vmatpush1.msra.mxu0 0.0
    %467 = vmatprep.mubr.f32.mxu0 0.0
    %468 = vmatmul.mubr.f32.gmra.mrb[0].mxu0 %v46
    %v469 = vpop.f32.mrb[0].mxu0
    %v470 = vadd.f32 0.0, %v469
    %v471 = vpop.f32.mrb[0].mxu0
    %v472 = vadd.f32 0.0, %v471
    %473 = vdwg.mxu0
    %474 = vmatprep.subr.mxu0 %v41
    %475 = vmatpush1.msra.mxu0 %v40
    %476 = vmatprep.subr.mxu0 0.0
    %477 = vmatpush1.msra.mxu0 0.0
    %478 = vmatprep.subr.mxu0 0.0
    %479 = vmatpush1.msra.mxu0 0.0
    %480 = vmatprep.subr.mxu0 0.0
    %481 = vmatpush1.msra.mxu0 0.0
    %482 = vmatprep.subr.mxu0 0.0
    %483 = vmatpush1.msra.mxu0 0.0
    %484 = vmatprep.subr.mxu0 0.0
    %485 = vmatpush1.msra.mxu0 0.0
    %486 = vmatprep.subr.mxu0 0.0
    %487 = vmatpush1.msra.mxu0 0.0
    %488 = vmatprep.subr.mxu0 0.0
    %489 = vmatpush1.msra.mxu0 0.0
    %490 = vmatprep.subr.mxu0 0.0
    %491 = vmatpush1.msra.mxu0 0.0
    %492 = vmatprep.subr.mxu0 0.0
    %493 = vmatpush1.msra.mxu0 0.0
    %494 = vmatprep.subr.mxu0 0.0
    %495 = vmatpush1.msra.mxu0 0.0
    %496 = vmatprep.subr.mxu0 0.0
    %497 = vmatpush1.msra.mxu0 0.0
    %498 = vmatprep.subr.mxu0 0.0
    %499 = vmatpush1.msra.mxu0 0.0
    %500 = vmatprep.subr.mxu0 0.0
    %501 = vmatpush1.msra.mxu0 0.0
    %502 = vmatprep.subr.mxu0 0.0
    %503 = vmatpush1.msra.mxu0 0.0
    %504 = vmatprep.subr.mxu0 0.0
    %505 = vmatpush1.msra.mxu0 0.0
    %506 = vmatprep.subr.mxu0 0.0
    %507 = vmatpush1.msra.mxu0 0.0
    %508 = vmatprep.subr.mxu0 0.0
    %509 = vmatpush1.msra.mxu0 0.0
    %510 = vmatprep.subr.mxu0 0.0
    %511 = vmatpush1.msra.mxu0 0.0
    %512 = vmatprep.subr.mxu0 0.0
    %513 = vmatpush1.msra.mxu0 0.0
    %514 = vmatprep.subr.mxu0 0.0
    %515 = vmatpush1.msra.mxu0 0.0
    %516 = vmatprep.subr.mxu0 0.0
    %517 = vmatpush1.msra.mxu0 0.0
    %518 = vmatprep.subr.mxu0 0.0
    %519 = vmatpush1.msra.mxu0 0.0
    %520 = vmatprep.subr.mxu0 0.0
    %521 = vmatpush1.msra.mxu0 0.0
    %522 = vmatprep.subr.mxu0 0.0
    %523 = vmatpush1.msra.mxu0 0.0
    %524 = vmatprep.subr.mxu0 0.0
    %525 = vmatpush1.msra.mxu0 0.0
    %526 = vmatprep.subr.mxu0 0.0
    %527 = vmatpush1.msra.mxu0 0.0
    %528 = vmatprep.subr.mxu0 0.0
    %529 = vmatpush1.msra.mxu0 0.0
    %530 = vmatprep.subr.mxu0 0.0
    %531 = vmatpush1.msra.mxu0 0.0
    %532 = vmatprep.subr.mxu0 0.0
    %533 = vmatpush1.msra.mxu0 0.0
    %534 = vmatprep.subr.mxu0 0.0
    %535 = vmatpush1.msra.mxu0 0.0
    %536 = vmatprep.subr.mxu0 0.0
    %537 = vmatpush1.msra.mxu0 0.0
    %538 = vmatprep.mubr.f32.mxu0 0.0
    %539 = vmatmul.mubr.f32.gmra.mrb[0].mxu0 %v46
    %v540 = vpop.f32.mrb[0].mxu0
    %v541 = vadd.f32 0.0, %v540
    %v542 = vpop.f32.mrb[0].mxu0
    %v543 = vadd.f32 0.0, %v542
    %544 = vdwg.mxu0
    %545 = vmatprep.subr.mxu0 %v43
    %546 = vmatpush1.msra.mxu0 %v42
    %547 = vmatprep.subr.mxu0 0.0
    %548 = vmatpush1.msra.mxu0 0.0
    %549 = vmatprep.subr.mxu0 0.0
    %550 = vmatpush1.msra.mxu0 0.0
    %551 = vmatprep.subr.mxu0 0.0
    %552 = vmatpush1.msra.mxu0 0.0
    %553 = vmatprep.subr.mxu0 0.0
    %554 = vmatpush1.msra.mxu0 0.0
    %555 = vmatprep.subr.mxu0 0.0
    %556 = vmatpush1.msra.mxu0 0.0
    %557 = vmatprep.subr.mxu0 0.0
    %558 = vmatpush1.msra.mxu0 0.0
    %559 = vmatprep.subr.mxu0 0.0
    %560 = vmatpush1.msra.mxu0 0.0
    %561 = vmatprep.subr.mxu0 0.0
    %562 = vmatpush1.msra.mxu0 0.0
    %563 = vmatprep.subr.mxu0 0.0
    %564 = vmatpush1.msra.mxu0 0.0
    %565 = vmatprep.subr.mxu0 0.0
    %566 = vmatpush1.msra.mxu0 0.0
    %567 = vmatprep.subr.mxu0 0.0
    %568 = vmatpush1.msra.mxu0 0.0
    %569 = vmatprep.subr.mxu0 0.0
    %570 = vmatpush1.msra.mxu0 0.0
    %571 = vmatprep.subr.mxu0 0.0
    %572 = vmatpush1.msra.mxu0 0.0
    %573 = vmatprep.subr.mxu0 0.0
    %574 = vmatpush1.msra.mxu0 0.0
    %575 = vmatprep.subr.mxu0 0.0
    %576 = vmatpush1.msra.mxu0 0.0
    %577 = vmatprep.subr.mxu0 0.0
    %578 = vmatpush1.msra.mxu0 0.0
    %579 = vmatprep.subr.mxu0 0.0
    %580 = vmatpush1.msra.mxu0 0.0
    %581 = vmatprep.subr.mxu0 0.0
    %582 = vmatpush1.msra.mxu0 0.0
    %583 = vmatprep.subr.mxu0 0.0
    %584 = vmatpush1.msra.mxu0 0.0
    %585 = vmatprep.subr.mxu0 0.0
    %586 = vmatpush1.msra.mxu0 0.0
    %587 = vmatprep.subr.mxu0 0.0
    %588 = vmatpush1.msra.mxu0 0.0
    %589 = vmatprep.subr.mxu0 0.0
    %590 = vmatpush1.msra.mxu0 0.0
    %591 = vmatprep.subr.mxu0 0.0
    %592 = vmatpush1.msra.mxu0 0.0
    %593 = vmatprep.subr.mxu0 0.0
    %594 = vmatpush1.msra.mxu0 0.0
    %595 = vmatprep.subr.mxu0 0.0
    %596 = vmatpush1.msra.mxu0 0.0
    %597 = vmatprep.subr.mxu0 0.0
    %598 = vmatpush1.msra.mxu0 0.0
    %599 = vmatprep.subr.mxu0 0.0
    %600 = vmatpush1.msra.mxu0 0.0
    %601 = vmatprep.subr.mxu0 0.0
    %602 = vmatpush1.msra.mxu0 0.0
    %603 = vmatprep.subr.mxu0 0.0
    %604 = vmatpush1.msra.mxu0 0.0
    %605 = vmatprep.subr.mxu0 0.0
    %606 = vmatpush1.msra.mxu0 0.0
    %607 = vmatprep.subr.mxu0 0.0
    %608 = vmatpush1.msra.mxu0 0.0
    %609 = vmatprep.mubr.f32.mxu0 0.0
    %610 = vmatmul.mubr.f32.gmra.mrb[0].mxu0 %v46
    %v611 = vpop.f32.mrb[0].mxu0
    %v612 = vadd.f32 0.0, %v611
    %v613 = vpop.f32.mrb[0].mxu0
    %v614 = vadd.f32 0.0, %v613
    %615 = vdwg.mxu0
    %v616 = vld [vmem:[%s1] sm:$0xff]
    %618 = vset.pattern.permute.xlu0 0
    %619 = vperm.xlu0 %618, %v616
    %v620 = vpop.permute.xlu0 %619
    %vm622 = vcmp.ge.f32.partialorder %v115, %v620
    %vm623 = vcmp.ge.f32.partialorder %v117, %v620
    %vm624 = vcmp.ge.f32.partialorder %v186, %v620
    %vm625 = vcmp.ge.f32.partialorder %v188, %v620
    %vm626 = vcmp.ge.f32.partialorder %v257, %v620
    %vm627 = vcmp.ge.f32.partialorder %v259, %v620
    %vm628 = vcmp.ge.f32.partialorder %v328, %v620
    %vm629 = vcmp.ge.f32.partialorder %v330, %v620
    %vm630 = vcmp.ge.f32.partialorder %v399, %v620
    %vm631 = vcmp.ge.f32.partialorder %v401, %v620
    %vm632 = vcmp.ge.f32.partialorder %v470, %v620
    %vm633 = vcmp.ge.f32.partialorder %v472, %v620
    %vm634 = vcmp.ge.f32.partialorder %v541, %v620
    %vm635 = vcmp.ge.f32.partialorder %v543, %v620
    %vm636 = vcmp.ge.f32.partialorder %v612, %v620
    %vm637 = vcmp.ge.f32.partialorder %v614, %v620
    %v638 = vsel %vm622, 1, 0
    %v639 = vsel %vm623, 1, 0
    %v640 = vsel %vm624, 1, 0
    %v641 = vsel %vm625, 1, 0
    %v642 = vsel %vm626, 1, 0
    %v643 = vsel %vm627, 1, 0
    %v644 = vsel %vm628, 1, 0
    %v645 = vsel %vm629, 1, 0
    %v646 = vsel %vm630, 1, 0
    %v647 = vsel %vm631, 1, 0
    %v648 = vsel %vm632, 1, 0
    %v649 = vsel %vm633, 1, 0
    %v650 = vsel %vm634, 1, 0
    %v651 = vsel %vm635, 1, 0
    %v652 = vsel %vm636, 1, 0
    %v653 = vsel %vm637, 1, 0
    %v654 = vcvt.s32.f32 %v638
    %v655 = vcvt.s32.f32 %v639
    %v656 = vcvt.s32.f32 %v640
    %v657 = vcvt.s32.f32 %v641
    %v658 = vcvt.s32.f32 %v642
    %v659 = vcvt.s32.f32 %v643
    %v660 = vcvt.s32.f32 %v644
    %v661 = vcvt.s32.f32 %v645
    %v662 = vcvt.s32.f32 %v646
    %v663 = vcvt.s32.f32 %v647
    %v664 = vcvt.s32.f32 %v648
    %v665 = vcvt.s32.f32 %v649
    %v666 = vcvt.s32.f32 %v650
    %v667 = vcvt.s32.f32 %v651
    %v668 = vcvt.s32.f32 %v652
    %v669 = vcvt.s32.f32 %v653
    %670 = vst [vmem:[#allocation5] sm:$0xff] %v654
    %671 = vst [vmem:[#allocation5 + $0x8] sm:$0xff] %v655
    %672 = vst [vmem:[#allocation5 + $0x10] sm:$0xff] %v656
    %673 = vst [vmem:[#allocation5 + $0x18] sm:$0xff] %v657
    %674 = vst [vmem:[#allocation5 + $0x20] sm:$0xff] %v658
    %675 = vst [vmem:[#allocation5 + $0x28] sm:$0xff] %v659
    %676 = vst [vmem:[#allocation5 + $0x30] sm:$0xff] %v660
    %677 = vst [vmem:[#allocation5 + $0x38] sm:$0xff] %v661
    %678 = vst [vmem:[#allocation5 + $0x40] sm:$0xff] %v662
    %679 = vst [vmem:[#allocation5 + $0x48] sm:$0xff] %v663
    %680 = vst [vmem:[#allocation5 + $0x50] sm:$0xff] %v664
    %681 = vst [vmem:[#allocation5 + $0x58] sm:$0xff] %v665
    %682 = vst [vmem:[#allocation5 + $0x60] sm:$0xff] %v666
    %683 = vst [vmem:[#allocation5 + $0x68] sm:$0xff] %v667
    %684 = vst [vmem:[#allocation5 + $0x70] sm:$0xff] %v668
    %685 = vst [vmem:[#allocation5 + $0x78] sm:$0xff] %v669
    // Predicated region
    $region18: #{tpu_custom_call.1} parent=1 // pred_check
      _
    $region19: #{tpu_custom_call.1} parent=1 // pred_check_branch
      %687 = sbr.rel (0) target = $region21
    $region20: #{tpu_custom_call.1} parent=1 // pred_region
      %s689 = ssub.s32 2048, 2048
      %690 = vsyncadd [#allocation4], %s689
      %s692 = sshll.u32 [#allocation5], 4
      %s693 = int_to_ptr.vmem [resolvable:$true] %s692
      %695 = dma.vmem_to_hbm [thread:$0]  %s693, 2048, %s3, [#allocation4]
    $region21: #{tpu_custom_call.1} parent=1 // pred_fallthru
      _
    // Predicated region
    $region22: #{tpu_custom_call.1} parent=1 // pred_check
      _
    $region23: #{tpu_custom_call.1} parent=1 // pred_check_branch
      %697 = sbr.rel (0) target = $region25
    $region24: #{tpu_custom_call.1} parent=1 // pred_region
      %698 = dma.done [#allocation4], 2048
    $region25: #{tpu_custom_call.1} parent=1 // pred_fallthru
      _
    %699 = vsyncpa [#allocation3], 1
    %700 = vsyncpa [#allocation4], 1

</llo_original>
